<compile_context>
chip_gen: v7x
topology: tpu7x:2x2x1
jax: 0.10.0
libtpu: 0.0.40
codegen_flags: <defaults>
</compile_context>

<pallas_src>
import jax
import jax.numpy as jnp
from jax import lax
from jax.experimental import pallas as pl
from jax.experimental.pallas import tpu as pltpu


_DEF_TILE_ROWS = 1024          # 1024 sublane-rows x 128 lanes = 131072 batch elems
_STATIC_UNROLL_MAX = 32        # static Python unroll only for small feature counts


def _full_net_kernel(wb_ref, x_ref, z_ref, o_ref):
    # wb_ref: SMEM [p+q+1]  -> (w_x[0..p-1], w_z[0..q-1], bias), scalar reads
    # x_ref:  VMEM [p, TILE_R, 128]   (feature, batch-sublane, batch-lane)
    # z_ref:  VMEM [q, TILE_R, 128]
    # o_ref:  VMEM [TILE_R, 128] f32  (fully lane/sublane-dense output tile)
    p = x_ref.shape[0]
    q = z_ref.shape[0]
    tr, lanes = o_ref.shape

    # Init accumulator with the bias (f32 accumulation regardless of input dtype).
    acc = jnp.full((tr, lanes), wb_ref[p + q], dtype=jnp.float32)

    if p + q <= _STATIC_UNROLL_MAX:
        # Small feature count: full static unroll, one streamed row per FMA.
        for k in range(p):
            acc = acc + wb_ref[k] * x_ref[k].astype(jnp.float32)
        for k in range(q):
            acc = acc + wb_ref[p + k] * z_ref[k].astype(jnp.float32)
    else:
        # Large feature count (realistic GLM/Lasso): bounded-unroll loops keep
        # code size and live ranges small while streaming one row per step.
        def x_body(k, a):
            return a + wb_ref[k] * x_ref[k].astype(jnp.float32)

        def z_body(k, a):
            return a + wb_ref[p + k] * z_ref[k].astype(jnp.float32)

        acc = lax.fori_loop(0, p, x_body, acc, unroll=8)
        acc = lax.fori_loop(0, q, z_body, acc, unroll=8)

    o_ref[...] = acc


def _budget_tile_rows(pq, requested, itemsize):
    """Pick TILE_R (units of 128-lane batch rows, multiple of 8) under a
    per-generation VMEM budget for the double-buffered input+output tiles."""
    try:
        vmem = int(pltpu.get_tpu_info().vmem_capacity_bytes)
    except Exception:  # CPU/interpret or API drift: assume the smallest (v7x)
        vmem = 64 << 20
    # Stay well under every generation's scoped-VMEM default (16 MiB on v5e),
    # so no vmem_limit_bytes override is needed.
    budget = min(vmem // 4, 12 << 20)
    per_row = 2 * 128 * (pq * itemsize + 4)     # 2 pipeline buffers, f32 output
    max_rows = max(8, (budget // per_row) // 8 * 8)
    rows = _DEF_TILE_ROWS if requested is None else int(requested)
    rows = max(8, min(rows, max_rows))
    return (rows // 8) * 8


def pack_params(weight, bias):
    """Pack nn.Linear(p+q, 1) params into one SMEM-friendly f32 vector
    (w_x..., w_z..., bias).  Hoist this out of any training hot loop."""
    return jnp.concatenate(
        [jnp.asarray(weight).reshape(-1), jnp.asarray(bias).reshape(-1)]
    ).astype(jnp.float32)


def _to_slab(A, n_pad):
    """[N, f] (natural layout) -> lane/sublane-dense [f, n_pad // 128, 128].
    This is the one layout pass the convenience wrapper pays; hoist it (build
    slabs once upstream) for hot loops and call full_net_apply directly."""
    N, f = A.shape
    At = A.T
    if n_pad != N:
        At = jnp.pad(At, ((0, 0), (0, n_pad - N)))
    return At.reshape(f, n_pad // 128, 128)


def full_net_apply(xs, zs, wb, *, tile_rows=None):
    """Hot path: pure pallas_call on pre-built dense slabs (no wrapper copies).

    xs: [p, R, 128], zs: [q, R, 128], wb: [p+q+1] f32 packed params.
    Returns [R, 128] f32 where flat index r*128 + c is batch row r*128 + c.
    """
    p, r_pad, lx = xs.shape
    q, rz, lz = zs.shape
    assert lx == 128 and lz == 128 and rz == r_pad, "slabs must be [f, R, 128]"
    assert wb.shape == (p + q + 1,), "wb must be (p+q+1,) packed params"

    itemsize = max(xs.dtype.itemsize, zs.dtype.itemsize)
    tile_r = tile_rows if tile_rows is not None else _budget_tile_rows(
        p + q, None, itemsize)
    tile_r = min(int(tile_r), r_pad)
    if tile_r < r_pad:
        # Largest multiple-of-8 tile <= requested that divides R exactly, so
        # every block is full (no partial-block tiles).
        t = (tile_r // 8) * 8
        while t >= 8 and r_pad % t:
            t -= 8
        tile_r = t if t >= 8 else r_pad

    grid = (r_pad // tile_r,)
    return pl.pallas_call(
        _full_net_kernel,
        out_shape=jax.ShapeDtypeStruct((r_pad, 128), jnp.float32),
        grid=grid,
        in_specs=[
            pl.BlockSpec(memory_space=pltpu.MemorySpace.SMEM),        # wb (whole)
            pl.BlockSpec((p, tile_r, 128), lambda i: (0, i, 0)),      # X slab
            pl.BlockSpec((q, tile_r, 128), lambda i: (0, i, 0)),      # Z slab
        ],
        out_specs=pl.BlockSpec((tile_r, 128), lambda i: (i, 0)),
        compiler_params=pltpu.CompilerParams(
            dimension_semantics=("parallel",),   # 2x split on v7x; no-op v5e/v6e
        ),
    )(wb, xs, zs)


def full_net_forward(X, Z, weight, bias, *, tile_rows=None):
    """Drop-in Full_Net.forward: X [N, p], Z [N, q], weight [1, p+q], bias [1].

    Returns [N, 1] float32, identical to nn.Linear(p+q, 1)(cat(X, Z, -1)).
    Inputs may be f32 or bf16 (bf16 halves HBM traffic; math stays f32).
    """
    N, p = X.shape
    Nz, q = Z.shape
    assert Nz == N, "X and Z must share the batch dimension"

    wb = pack_params(weight, bias)
    itemsize = max(X.dtype.itemsize, Z.dtype.itemsize)

    r_total = pl.cdiv(N, 128)
    tile_r = _budget_tile_rows(p + q, tile_rows, itemsize)
    if r_total <= tile_r:
        tile_r = r_total                      # single full block (legal shape)
    elif tile_rows is None:
        # For very large N keep >= ~4 pipelined grid steps per TensorCore
        # (v7x: 2 TCs share the "parallel" axis) instead of 1-2 giant tiles.
        min_steps = 8
        if pl.cdiv(r_total, tile_r) < min_steps:
            tile_r = max(8, ((pl.cdiv(r_total, min_steps) + 7) // 8) * 8)

    r_pad = pl.cdiv(r_total, tile_r) * tile_r
    n_pad = r_pad * 128

    xs = _to_slab(X, n_pad)
    zs = _to_slab(Z, n_pad)

    out2d = full_net_apply(xs, zs, wb, tile_rows=tile_r)
    return out2d.reshape(-1)[:N].reshape(N, 1)


def full_net_reference(X, Z, weight, bias):
    combined = jnp.concatenate([X.astype(jnp.float32), Z.astype(jnp.float32)],
                               axis=-1)
    return combined @ weight.T + bias


if __name__ == "__main__":
    key = jax.random.PRNGKey(0)
    (kx, kz, kw, kb, kx2, kz2, kx3, kz3,
     kw3, kb3, kx4, kz4) = jax.random.split(key, 12)

    # ---- Module default sizes: p=2, q=5 ----------------------------------
    p, q = 2, 5
    bound = 1.0 / jnp.sqrt(jnp.float32(p + q))
    weight = jax.random.uniform(kw, (1, p + q), dtype=jnp.float32,
                                minval=-bound, maxval=bound)
    bias = jax.random.uniform(kb, (1,), dtype=jnp.float32,
                              minval=-bound, maxval=bound)

    # Case 1: tiny toy batch (single partial-lane block).
    N1 = 8
    X1 = jax.random.normal(kx, (N1, p), dtype=jnp.float32)
    Z1 = jax.random.normal(kz, (N1, q), dtype=jnp.float32)
    out1 = full_net_forward(X1, Z1, weight, bias)
    jax.block_until_ready(out1)
    ref1 = full_net_reference(X1, Z1, weight, bias)
    assert out1.shape == (N1, 1)
    assert jnp.allclose(out1, ref1, atol=1e-5, rtol=1e-5)

    # Case 2: ragged batch + explicit small tile -> multi-step grid + padding.
    N2 = 5000
    X2 = jax.random.normal(kx2, (N2, p), dtype=jnp.float32)
    Z2 = jax.random.normal(kz2, (N2, q), dtype=jnp.float32)
    out2 = full_net_forward(X2, Z2, weight, bias, tile_rows=8)
    jax.block_until_ready(out2)
    ref2 = full_net_reference(X2, Z2, weight, bias)
    assert out2.shape == (N2, 1)
    assert jnp.allclose(out2, ref2, atol=1e-5, rtol=1e-5)

    # Case 3: wide feature count -> exercises the bounded-unroll fori path.
    p3, q3 = 48, 80
    bound3 = 1.0 / jnp.sqrt(jnp.float32(p3 + q3))
    weight3 = jax.random.uniform(kw3, (1, p3 + q3), dtype=jnp.float32,
                                 minval=-bound3, maxval=bound3)
    bias3 = jax.random.uniform(kb3, (1,), dtype=jnp.float32,
                               minval=-bound3, maxval=bound3)
    N3 = 512
    X3 = jax.random.normal(kx3, (N3, p3), dtype=jnp.float32)
    Z3 = jax.random.normal(kz3, (N3, q3), dtype=jnp.float32)
    out3 = full_net_forward(X3, Z3, weight3, bias3)
    jax.block_until_ready(out3)
    ref3 = full_net_reference(X3, Z3, weight3, bias3)
    assert out3.shape == (N3, 1)
    assert jnp.allclose(out3, ref3, atol=1e-4, rtol=1e-4)

    # Case 4: bf16 inputs (half the HBM stream), f32 accumulation in-kernel.
    N4 = 2048
    X4 = jax.random.normal(kx4, (N4, p), dtype=jnp.float32).astype(jnp.bfloat16)
    Z4 = jax.random.normal(kz4, (N4, q), dtype=jnp.float32).astype(jnp.bfloat16)
    out4 = full_net_forward(X4, Z4, weight, bias)
    jax.block_until_ready(out4)
    ref4 = full_net_reference(X4, Z4, weight, bias)
    assert out4.shape == (N4, 1)
    assert jnp.allclose(out4, ref4, atol=1e-4, rtol=1e-4)

    print("KERNEL_OK")
</pallas_src>

<mosaic_0001>
module attributes {stable_mosaic.version = 11 : i64} {
  func.func @_full_net_kernel(%arg0: i32, %arg1: memref<8xf32, #tpu.memory_space<smem>>, %arg2: memref<2x1x128xf32, #tpu.memory_space<vmem>>, %arg3: memref<5x1x128xf32, #tpu.memory_space<vmem>>, %arg4: memref<1x128xf32, #tpu.memory_space<vmem>>) attributes {dimension_semantics = [#tpu.dimension_semantics<parallel>], iteration_bounds = array<i64: 1>, scalar_prefetch = 0 : i64, scratch_operands = 0 : i64, tpu.core_type = #tpu.core_type<tc>, window_params = [{transform_indices = @transform_0, window_bounds = array<i64: 8>}, {transform_indices = @transform_1, window_bounds = array<i64: 2, 1, 128>}, {transform_indices = @transform_2, window_bounds = array<i64: 5, 1, 128>}, {transform_indices = @transform_3, window_bounds = array<i64: 1, 128>}]} {
    %c7 = arith.constant 7 : index
    %0 = memref.load %arg1[%c7] : memref<8xf32, #tpu.memory_space<smem>>
    %1 = vector.broadcast %0 : f32 to vector<1x128xf32>
    %c0 = arith.constant 0 : index
    %2 = memref.load %arg1[%c0] : memref<8xf32, #tpu.memory_space<smem>>
    %c0_0 = arith.constant 0 : index
    %c0_1 = arith.constant 0 : index
    %c0_2 = arith.constant 0 : index
    %3 = vector.load %arg2[%c0_0, %c0_1, %c0_2] : memref<2x1x128xf32, #tpu.memory_space<vmem>>, vector<1x1x128xf32>
    %4 = vector.shape_cast %3 : vector<1x1x128xf32> to vector<1x128xf32>
    %5 = vector.broadcast %2 : f32 to vector<1x128xf32>
    %6 = arith.mulf %5, %4 : vector<1x128xf32>
    %7 = arith.addf %1, %6 : vector<1x128xf32>
    %c1 = arith.constant 1 : index
    %8 = memref.load %arg1[%c1] : memref<8xf32, #tpu.memory_space<smem>>
    %c1_3 = arith.constant 1 : index
    %c0_4 = arith.constant 0 : index
    %c0_5 = arith.constant 0 : index
    %9 = vector.load %arg2[%c1_3, %c0_4, %c0_5] : memref<2x1x128xf32, #tpu.memory_space<vmem>>, vector<1x1x128xf32>
    %10 = vector.shape_cast %9 : vector<1x1x128xf32> to vector<1x128xf32>
    %11 = vector.broadcast %8 : f32 to vector<1x128xf32>
    %12 = arith.mulf %11, %10 : vector<1x128xf32>
    %13 = arith.addf %7, %12 : vector<1x128xf32>
    %c2 = arith.constant 2 : index
    %14 = memref.load %arg1[%c2] : memref<8xf32, #tpu.memory_space<smem>>
    %c0_6 = arith.constant 0 : index
    %c0_7 = arith.constant 0 : index
    %c0_8 = arith.constant 0 : index
    %15 = vector.load %arg3[%c0_6, %c0_7, %c0_8] : memref<5x1x128xf32, #tpu.memory_space<vmem>>, vector<1x1x128xf32>
    %16 = vector.shape_cast %15 : vector<1x1x128xf32> to vector<1x128xf32>
    %17 = vector.broadcast %14 : f32 to vector<1x128xf32>
    %18 = arith.mulf %17, %16 : vector<1x128xf32>
    %19 = arith.addf %13, %18 : vector<1x128xf32>
    %c3 = arith.constant 3 : index
    %20 = memref.load %arg1[%c3] : memref<8xf32, #tpu.memory_space<smem>>
    %c1_9 = arith.constant 1 : index
    %c0_10 = arith.constant 0 : index
    %c0_11 = arith.constant 0 : index
    %21 = vector.load %arg3[%c1_9, %c0_10, %c0_11] : memref<5x1x128xf32, #tpu.memory_space<vmem>>, vector<1x1x128xf32>
    %22 = vector.shape_cast %21 : vector<1x1x128xf32> to vector<1x128xf32>
    %23 = vector.broadcast %20 : f32 to vector<1x128xf32>
    %24 = arith.mulf %23, %22 : vector<1x128xf32>
    %25 = arith.addf %19, %24 : vector<1x128xf32>
    %c4 = arith.constant 4 : index
    %26 = memref.load %arg1[%c4] : memref<8xf32, #tpu.memory_space<smem>>
    %c2_12 = arith.constant 2 : index
    %c0_13 = arith.constant 0 : index
    %c0_14 = arith.constant 0 : index
    %27 = vector.load %arg3[%c2_12, %c0_13, %c0_14] : memref<5x1x128xf32, #tpu.memory_space<vmem>>, vector<1x1x128xf32>
    %28 = vector.shape_cast %27 : vector<1x1x128xf32> to vector<1x128xf32>
    %29 = vector.broadcast %26 : f32 to vector<1x128xf32>
    %30 = arith.mulf %29, %28 : vector<1x128xf32>
    %31 = arith.addf %25, %30 : vector<1x128xf32>
    %c5 = arith.constant 5 : index
    %32 = memref.load %arg1[%c5] : memref<8xf32, #tpu.memory_space<smem>>
    %c3_15 = arith.constant 3 : index
    %c0_16 = arith.constant 0 : index
    %c0_17 = arith.constant 0 : index
    %33 = vector.load %arg3[%c3_15, %c0_16, %c0_17] : memref<5x1x128xf32, #tpu.memory_space<vmem>>, vector<1x1x128xf32>
    %34 = vector.shape_cast %33 : vector<1x1x128xf32> to vector<1x128xf32>
    %35 = vector.broadcast %32 : f32 to vector<1x128xf32>
    %36 = arith.mulf %35, %34 : vector<1x128xf32>
    %37 = arith.addf %31, %36 : vector<1x128xf32>
    %c6 = arith.constant 6 : index
    %38 = memref.load %arg1[%c6] : memref<8xf32, #tpu.memory_space<smem>>
    %c4_18 = arith.constant 4 : index
    %c0_19 = arith.constant 0 : index
    %c0_20 = arith.constant 0 : index
    %39 = vector.load %arg3[%c4_18, %c0_19, %c0_20] : memref<5x1x128xf32, #tpu.memory_space<vmem>>, vector<1x1x128xf32>
    %40 = vector.shape_cast %39 : vector<1x1x128xf32> to vector<1x128xf32>
    %41 = vector.broadcast %38 : f32 to vector<1x128xf32>
    %42 = arith.mulf %41, %40 : vector<1x128xf32>
    %43 = arith.addf %37, %42 : vector<1x128xf32>
    %c0_21 = arith.constant 0 : index
    %c0_22 = arith.constant 0 : index
    %44 = vector.load %arg4[%c0_21, %c0_22] : memref<1x128xf32, #tpu.memory_space<vmem>>, vector<1x128xf32>
    tpu.vector_store %arg4[%c0_21, %c0_22], %43 {strides = array<i32>} : memref<1x128xf32, #tpu.memory_space<vmem>>, vector<1x128xf32>,
    return
  }
  func.func @transform_0(%arg0: i32) -> i32 {
    %c0_i32 = arith.constant 0 : i32
    %c0_i32_0 = arith.constant 0 : i32
    return %c0_i32 : i32
  }
  func.func @transform_1(%arg0: i32) -> (i32, i32, i32) {
    %c0_i32 = arith.constant 0 : i32
    %c0_i32_0 = arith.constant 0 : i32
    %c0_i32_1 = arith.constant 0 : i32
    return %c0_i32, %arg0, %c0_i32_0 : i32, i32, i32
  }
  func.func @transform_2(%arg0: i32) -> (i32, i32, i32) {
    %c0_i32 = arith.constant 0 : i32
    %c0_i32_0 = arith.constant 0 : i32
    %c0_i32_1 = arith.constant 0 : i32
    return %c0_i32, %arg0, %c0_i32_0 : i32, i32, i32
  }
  func.func @transform_3(%arg0: i32) -> (i32, i32) {
    %c0_i32 = arith.constant 0 : i32
    %c0_i32_0 = arith.constant 0 : i32
    return %arg0, %c0_i32 : i32, i32
  }
}

</mosaic_0001>

<llo_original>
// kernel: tpu_custom_call.1
$region0: #{tpu_custom_call.1}
  #allocation0 [shape = 'u32[]', space=smem, size = 0x4, offset = 0x4, fixed_abs, tag = 'smem constant byte address 0x4 - core index']
  #allocation1 [shape = 'u32[144,128]{1,0:T(1,128)}', space=vmem, size = 0x12000, scoped, tag = 'internal scratch']
  %s0 = inlined_call_operand.hbm [shape: f32[8], index: 0, kind: input, shape index: {}]
  %s1 = inlined_call_operand.vmem [shape: f32[2,1,128], index: 1, kind: input, shape index: {}]
  %s2 = inlined_call_operand.vmem [shape: f32[5,1,128], index: 2, kind: input, shape index: {}]
  %s3 = inlined_call_operand.hbm [shape: f32[1,128], index: 3, kind: output, shape index: {}]
  %s4 = sld [smem:[#allocation0]]
  $region26: #{tpu_custom_call.1} parent=0
    _
  %s6 = ssub.s32 1, %s4
  %s7 = scalar_select 0, %s6, %s4
  $region1: #{tpu_custom_call.1} parent=0
    #allocation2 [shape = 'u8[512]{0}', space=smem, size = 0x200, scoped, tag = 'input window, operand 0, single buffered']
    #allocation3 [shape = 's32[1]{0}', space=sflag, size = 0x4, scoped, tag = 'scoped memory for tpu_custom_call.1']
    #allocation4 [shape = 's32[1]{0}', space=sflag, size = 0x4, scoped, tag = 'scoped memory for tpu_custom_call.1']
    #allocation5 [shape = 'u8[512]{0}', space=vmem, size = 0x400, scoped, tag = 'output window, operand 0, single buffered']
    %8 = vsyncpa [#allocation4], 0
    %9 = vsyncpa [#allocation3], 0
    // Predicated region
    $region2: #{tpu_custom_call.1} parent=1 // pred_check
      _
    $region3: #{tpu_custom_call.1} parent=1 // pred_check_branch
      %11 = sbr.rel (0) target = $region5
    $region4: #{tpu_custom_call.1} parent=1 // pred_region
      %s13 = ssub.s32 16, 16
      %14 = vsyncadd [#allocation4], %s13
      %17 = dma.hbm_to_smem %s0, 16, [#allocation2], [#allocation4]
    $region5: #{tpu_custom_call.1} parent=1 // pred_fallthru
      _
    // Predicated region
    $region6: #{tpu_custom_call.1} parent=1 // pred_check
      _
    $region7: #{tpu_custom_call.1} parent=1 // pred_check_branch
      %19 = sbr.rel (0) target = $region9
    $region8: #{tpu_custom_call.1} parent=1 // pred_region
      _
    $region9: #{tpu_custom_call.1} parent=1 // pred_fallthru
      _
    // Predicated region
    $region10: #{tpu_custom_call.1} parent=1 // pred_check
      _
    $region11: #{tpu_custom_call.1} parent=1 // pred_check_branch
      %21 = sbr.rel (0) target = $region13
    $region12: #{tpu_custom_call.1} parent=1 // pred_region
      _
    $region13: #{tpu_custom_call.1} parent=1 // pred_fallthru
      _
    // Predicated region
    $region14: #{tpu_custom_call.1} parent=1 // pred_check
      _
    $region15: #{tpu_custom_call.1} parent=1 // pred_check_branch
      %23 = sbr.rel (0) target = $region17
    $region16: #{tpu_custom_call.1} parent=1 // pred_region
      %24 = dma.done [#allocation4], 16
    $region17: #{tpu_custom_call.1} parent=1 // pred_fallthru
      _
    %25 = sfence
    %s26 = sld [smem:[#allocation2 + $0x7]]
    %v27 = vstv %s26
    %s28 = sld [smem:[#allocation2]]
    %v29 = vld [vmem:[%s1] sm:$0x1]
    %v30 = vstv %s28
    %v31 = vmul.f32 %v30, %v29
    %v32 = vadd.f32 %v27, %v31
    %s33 = sld [smem:[#allocation2 + $0x1]]
    %s34 = scalar_lea.vmem %s1, 1
    %v35 = vld [vmem:[%s34] sm:$0x1]
    %v36 = vstv %s33
    %v37 = vmul.f32 %v36, %v35
    %v38 = vadd.f32 %v32, %v37
    %s39 = sld [smem:[#allocation2 + $0x2]]
    %v40 = vld [vmem:[%s2] sm:$0x1]
    %v41 = vstv %s39
    %v42 = vmul.f32 %v41, %v40
    %v43 = vadd.f32 %v38, %v42
    %s44 = sld [smem:[#allocation2 + $0x3]]
    %s45 = scalar_lea.vmem %s2, 1
    %v46 = vld [vmem:[%s45] sm:$0x1]
    %v47 = vstv %s44
    %v48 = vmul.f32 %v47, %v46
    %v49 = vadd.f32 %v43, %v48
    %s50 = sld [smem:[#allocation2 + $0x4]]
    %s51 = scalar_lea.vmem %s2, 2
    %v52 = vld [vmem:[%s51] sm:$0x1]
    %v53 = vstv %s50
    %v54 = vmul.f32 %v53, %v52
    %v55 = vadd.f32 %v49, %v54
    %s56 = sld [smem:[#allocation2 + $0x5]]
    %s57 = scalar_lea.vmem %s2, 3
    %v58 = vld [vmem:[%s57] sm:$0x1]
    %v59 = vstv %s56
    %v60 = vmul.f32 %v59, %v58
    %v61 = vadd.f32 %v55, %v60
    %s62 = sld [smem:[#allocation2 + $0x6]]
    %s63 = scalar_lea.vmem %s2, 4
    %v64 = vld [vmem:[%s63] sm:$0x1]
    %v65 = vstv %s62
    %v66 = vmul.f32 %v65, %v64
    %v67 = vadd.f32 %v61, %v66
    %68 = vst [vmem:[#allocation5] sm:$0x1] %v67
    // Predicated region
    $region18: #{tpu_custom_call.1} parent=1 // pred_check
      _
    $region19: #{tpu_custom_call.1} parent=1 // pred_check_branch
      %70 = sbr.rel (0) target = $region21
    $region20: #{tpu_custom_call.1} parent=1 // pred_region
      %s72 = ssub.s32 16, 16
      %73 = vsyncadd [#allocation3], %s72
      %s75 = sshll.u32 [#allocation5], 4
      %s76 = int_to_ptr.vmem [resolvable:$true] %s75
      %78 = dma.vmem_to_hbm [thread:$0]  %s76, 16, %s3, [#allocation3]
    $region21: #{tpu_custom_call.1} parent=1 // pred_fallthru
      _
    // Predicated region
    $region22: #{tpu_custom_call.1} parent=1 // pred_check
      _
    $region23: #{tpu_custom_call.1} parent=1 // pred_check_branch
      %80 = sbr.rel (0) target = $region25
    $region24: #{tpu_custom_call.1} parent=1 // pred_region
      %81 = dma.done [#allocation3], 16
    $region25: #{tpu_custom_call.1} parent=1 // pred_fallthru
      _
    %82 = vsyncpa [#allocation3], 1
    %83 = vsyncpa [#allocation4], 1

</llo_original>
